<compile_context>
chip_gen: v6e
topology: v6e:2x2x1
jax: 0.10.0
libtpu: 0.0.40
codegen_flags: <defaults>
</compile_context>

<pallas_src>
import functools
import math

import jax
import jax.numpy as jnp
from jax.experimental import pallas as pl
from jax.experimental.pallas import tpu as pltpu


def _patch_embed_kernel(x_ref, w_ref, pe_ref, o_ref, *, patch_len, stride,
                        num_patches, d_model):
    # x_ref : (TB, L_pad)                bf16  padded series rows
    # w_ref : (patch_len, d_model)       bf16  Linear weight, pre-transposed
    # pe_ref: (num_patches, d_model)     f32   positional table
    # o_ref : (TB, num_patches*d_model)  f32
    x = x_ref[...]
    w = w_ref[...]
    pe = pe_ref[...]
    pieces = []
    for p in range(num_patches):                # static unroll: in-kernel unfold
        xp = x[:, p * stride:p * stride + patch_len]             # (TB, patch_len)
        y = jnp.dot(xp, w, preferred_element_type=jnp.float32)   # (TB, D) on MXU
        pieces.append(y + pe[p:p + 1, :])                        # add pe row p
    # Single lane-dense store of the whole (TB, P*D) block (no masked vst).
    o_ref[...] = jnp.concatenate(pieces, axis=-1).astype(o_ref.dtype)


def _choose_row_block(bn, num_patches, d_model):
    """Rows of the padded series handled per grid step."""
    # Target ~1024 output rows (bn * num_patches) per step, capped so the f32
    # accumulator block stays ~2 MiB (comfortable on v5e 16 MiB scoped default
    # and v7x 64 MiB physical VMEM, with double buffering).
    tb = max(1, 1024 // max(num_patches, 1))
    tb = min(tb, max(1, (2 * 1024 * 1024) // (4 * max(num_patches * d_model, 1))))
    if tb >= bn:
        return bn, bn                       # one block spans the full array dim
    tb = max(8, (tb // 8) * 8)              # second-minor block dim: multiple of 8
    bn_pad = ((bn + tb - 1) // tb) * tb
    return tb, bn_pad


def patch_embedding_pallas(x, weight, d_model, patch_len, stride, padding):
    """x: [B, n_vars, seq_len] f32. weight: [d_model, patch_len] (torch Linear layout).

    Returns (out [B*n_vars, num_patches, d_model] f32, n_vars), matching PyTorch.
    """
    B, n_vars, seq_len = x.shape
    BN = B * n_vars
    x2 = x.reshape(BN, seq_len)

    # --- ReplicationPad1d((0, padding)): replicate last element on the right ---
    if padding > 0:
        x2 = jnp.concatenate([x2, jnp.repeat(x2[:, -1:], padding, axis=-1)], axis=-1)
    L_pad = seq_len + padding
    num_patches = (L_pad - patch_len) // stride + 1

    # --- positional embedding table, rows [0, num_patches) (odd d_model safe) ---
    position = jnp.arange(num_patches, dtype=jnp.float32)[:, None]
    div_term = jnp.exp(jnp.arange(0, d_model, 2, dtype=jnp.float32)
                       * (-math.log(10000.0) / d_model))
    pe = jnp.zeros((num_patches, d_model), dtype=jnp.float32)
    pe = pe.at[:, 0::2].set(jnp.sin(position * div_term))
    pe = pe.at[:, 1::2].set(jnp.cos(position * div_term)[:, : d_model // 2])

    # bf16 MXU inputs (halves HBM read bytes); accumulation and output stay f32.
    x_b = x2.astype(jnp.bfloat16)
    w_t = weight.T.astype(jnp.bfloat16)               # (patch_len, d_model)

    tb, bn_pad = _choose_row_block(BN, num_patches, d_model)
    if bn_pad != BN:
        x_b = jnp.pad(x_b, ((0, bn_pad - BN), (0, 0)))

    kernel = functools.partial(
        _patch_embed_kernel, patch_len=patch_len, stride=stride,
        num_patches=num_patches, d_model=d_model)

    out2d = pl.pallas_call(
        kernel,
        out_shape=jax.ShapeDtypeStruct((bn_pad, num_patches * d_model), jnp.float32),
        grid_spec=pltpu.PrefetchScalarGridSpec(
            num_scalar_prefetch=0,
            grid=(bn_pad // tb,),
            in_specs=[
                pl.BlockSpec((tb, L_pad), lambda i: (i, 0)),
                pl.BlockSpec((patch_len, d_model), lambda i: (0, 0)),   # resident
                pl.BlockSpec((num_patches, d_model), lambda i: (0, 0)), # resident
            ],
            out_specs=pl.BlockSpec((tb, num_patches * d_model), lambda i: (i, 0)),
        ),
        compiler_params=pltpu.CompilerParams(
            dimension_semantics=("parallel",),
            vmem_limit_bytes=48 * 1024 * 1024),
    )(x_b, w_t, pe)

    out = out2d[:BN].reshape(BN, num_patches, d_model)
    # Dropout is identity in eval mode (deterministic forward).
    # TODO(synk): training-mode dropout (random mask + 1/(1-p) scaling) not implemented.
    return out, n_vars


if __name__ == "__main__":
    # Small shapes consistent with the module.
    B, n_vars, seq_len = 2, 4, 16
    d_model, patch_len, stride, padding, dropout = 32, 8, 4, 4, 0.1

    key = jax.random.PRNGKey(0)
    kx, kw = jax.random.split(key)
    x = jax.random.normal(kx, (B, n_vars, seq_len), dtype=jnp.float32)
    # Deterministic Linear weight init (torch layout: [d_model, patch_len]).
    bound = 1.0 / math.sqrt(patch_len)
    weight = jax.random.uniform(kw, (d_model, patch_len),
                                minval=-bound, maxval=bound, dtype=jnp.float32)

    out, nv = patch_embedding_pallas(x, weight, d_model, patch_len, stride, padding)
    out = jax.block_until_ready(out)

    # Reference in pure JAX (inputs bf16-cast to match the kernel's MXU dtype).
    pad = jnp.repeat(x[:, :, -1:], padding, axis=-1)
    x_pad = jnp.concatenate([x, pad], axis=-1)
    P = (seq_len + padding - patch_len) // stride + 1
    idx = jnp.arange(P)[:, None] * stride + jnp.arange(patch_len)[None, :]
    patches_ref = x_pad[:, :, idx].reshape(B * n_vars, P, patch_len)
    patches_b = patches_ref.astype(jnp.bfloat16).astype(jnp.float32)
    w_b = weight.T.astype(jnp.bfloat16).astype(jnp.float32)
    pos = jnp.arange(P, dtype=jnp.float32)[:, None]
    div = jnp.exp(jnp.arange(0, d_model, 2, dtype=jnp.float32)
                  * (-math.log(10000.0) / d_model))
    pe_ref = jnp.zeros((P, d_model), jnp.float32)
    pe_ref = pe_ref.at[:, 0::2].set(jnp.sin(pos * div))
    pe_ref = pe_ref.at[:, 1::2].set(jnp.cos(pos * div)[:, : d_model // 2])
    ref = (patches_b[:, :, :, None] * w_b[None, None, :, :]).sum(axis=2) + pe_ref[None]

    assert out.shape == (B * n_vars, P, d_model)
    assert nv == n_vars
    assert jnp.allclose(out, ref, atol=2e-3, rtol=2e-3)
    print("KERNEL_OK")
</pallas_src>

<mosaic_0001>
module attributes {stable_mosaic.version = 11 : i64} {
  func.func @_patch_embed_kernel(%arg0: i32, %arg1: memref<8x20xbf16, #tpu.memory_space<vmem>>, %arg2: memref<8x32xbf16, #tpu.memory_space<vmem>>, %arg3: memref<4x32xf32, #tpu.memory_space<vmem>>, %arg4: memref<8x128xf32, #tpu.memory_space<vmem>>) attributes {dimension_semantics = [#tpu.dimension_semantics<parallel>], iteration_bounds = array<i64: 1>, scalar_prefetch = 0 : i64, scratch_operands = 0 : i64, tpu.core_type = #tpu.core_type<tc>, window_params = [{transform_indices = @transform_0, window_bounds = array<i64: 8, 20>}, {pipeline_mode = #tpu.pipeline_mode<synchronous>, transform_indices = @transform_1, window_bounds = array<i64: 8, 32>}, {pipeline_mode = #tpu.pipeline_mode<synchronous>, transform_indices = @transform_2, window_bounds = array<i64: 4, 32>}, {transform_indices = @transform_3, window_bounds = array<i64: 8, 128>}]} {
    %c0 = arith.constant 0 : index
    %c0_0 = arith.constant 0 : index
    %0 = vector.load %arg1[%c0, %c0_0] : memref<8x20xbf16, #tpu.memory_space<vmem>>, vector<8x20xbf16>
    %c0_1 = arith.constant 0 : index
    %c0_2 = arith.constant 0 : index
    %1 = vector.load %arg2[%c0_1, %c0_2] : memref<8x32xbf16, #tpu.memory_space<vmem>>, vector<8x32xbf16>
    %c0_3 = arith.constant 0 : index
    %c0_4 = arith.constant 0 : index
    %2 = vector.load %arg3[%c0_3, %c0_4] : memref<4x32xf32, #tpu.memory_space<vmem>>, vector<4x32xf32>
    %3 = vector.extract_strided_slice %0 {offsets = [0, 0], sizes = [8, 8], strides = [1, 1]} : vector<8x20xbf16> to vector<8x8xbf16>
    %cst = arith.constant dense<0.000000e+00> : vector<8x32xf32>
    %4 = tpu.matmul %3, %1, %cst {dimension_numbers = #tpu.dot_dimension_numbers<[1], [0], [0], [1], [0, 0, 1, 1], [], []>} : vector<8x8xbf16>, vector<8x32xbf16>, vector<8x32xf32> -> vector<8x32xf32>
    %5 = vector.extract_strided_slice %2 {offsets = [0, 0], sizes = [1, 32], strides = [1, 1]} : vector<4x32xf32> to vector<1x32xf32>
    %6 = vector.broadcast %5 : vector<1x32xf32> to vector<8x32xf32>
    %7 = arith.addf %4, %6 : vector<8x32xf32>
    %8 = vector.extract_strided_slice %0 {offsets = [0, 4], sizes = [8, 8], strides = [1, 1]} : vector<8x20xbf16> to vector<8x8xbf16>
    %cst_5 = arith.constant dense<0.000000e+00> : vector<8x32xf32>
    %9 = tpu.matmul %8, %1, %cst_5 {dimension_numbers = #tpu.dot_dimension_numbers<[1], [0], [0], [1], [0, 0, 1, 1], [], []>} : vector<8x8xbf16>, vector<8x32xbf16>, vector<8x32xf32> -> vector<8x32xf32>
    %10 = vector.extract_strided_slice %2 {offsets = [1, 0], sizes = [1, 32], strides = [1, 1]} : vector<4x32xf32> to vector<1x32xf32>
    %11 = vector.broadcast %10 : vector<1x32xf32> to vector<8x32xf32>
    %12 = arith.addf %9, %11 : vector<8x32xf32>
    %13 = vector.extract_strided_slice %0 {offsets = [0, 8], sizes = [8, 8], strides = [1, 1]} : vector<8x20xbf16> to vector<8x8xbf16>
    %cst_6 = arith.constant dense<0.000000e+00> : vector<8x32xf32>
    %14 = tpu.matmul %13, %1, %cst_6 {dimension_numbers = #tpu.dot_dimension_numbers<[1], [0], [0], [1], [0, 0, 1, 1], [], []>} : vector<8x8xbf16>, vector<8x32xbf16>, vector<8x32xf32> -> vector<8x32xf32>
    %15 = vector.extract_strided_slice %2 {offsets = [2, 0], sizes = [1, 32], strides = [1, 1]} : vector<4x32xf32> to vector<1x32xf32>
    %16 = vector.broadcast %15 : vector<1x32xf32> to vector<8x32xf32>
    %17 = arith.addf %14, %16 : vector<8x32xf32>
    %18 = vector.extract_strided_slice %0 {offsets = [0, 12], sizes = [8, 8], strides = [1, 1]} : vector<8x20xbf16> to vector<8x8xbf16>
    %cst_7 = arith.constant dense<0.000000e+00> : vector<8x32xf32>
    %19 = tpu.matmul %18, %1, %cst_7 {dimension_numbers = #tpu.dot_dimension_numbers<[1], [0], [0], [1], [0, 0, 1, 1], [], []>} : vector<8x8xbf16>, vector<8x32xbf16>, vector<8x32xf32> -> vector<8x32xf32>
    %20 = vector.extract_strided_slice %2 {offsets = [3, 0], sizes = [1, 32], strides = [1, 1]} : vector<4x32xf32> to vector<1x32xf32>
    %21 = vector.broadcast %20 : vector<1x32xf32> to vector<8x32xf32>
    %22 = arith.addf %19, %21 : vector<8x32xf32>
    %23 = tpu.concatenate %7, %12, %17, %22 in 1 : vector<8x32xf32>, vector<8x32xf32>, vector<8x32xf32>, vector<8x32xf32> -> vector<8x128xf32>
    %c0_8 = arith.constant 0 : index
    %c0_9 = arith.constant 0 : index
    %24 = vector.load %arg4[%c0_8, %c0_9] : memref<8x128xf32, #tpu.memory_space<vmem>>, vector<8x128xf32>
    tpu.vector_store %arg4[%c0_8, %c0_9], %23 {strides = array<i32>} : memref<8x128xf32, #tpu.memory_space<vmem>>, vector<8x128xf32>,
    return
  }
  func.func @transform_0(%arg0: i32) -> (i32, i32) {
    %c0_i32 = arith.constant 0 : i32
    %c0_i32_0 = arith.constant 0 : i32
    return %arg0, %c0_i32 : i32, i32
  }
  func.func @transform_1(%arg0: i32) -> (i32, i32) {
    %c0_i32 = arith.constant 0 : i32
    %c0_i32_0 = arith.constant 0 : i32
    %c0_i32_1 = arith.constant 0 : i32
    return %c0_i32, %c0_i32_0 : i32, i32
  }
  func.func @transform_2(%arg0: i32) -> (i32, i32) {
    %c0_i32 = arith.constant 0 : i32
    %c0_i32_0 = arith.constant 0 : i32
    %c0_i32_1 = arith.constant 0 : i32
    return %c0_i32, %c0_i32_0 : i32, i32
  }
  func.func @transform_3(%arg0: i32) -> (i32, i32) {
    %c0_i32 = arith.constant 0 : i32
    %c0_i32_0 = arith.constant 0 : i32
    return %arg0, %c0_i32 : i32, i32
  }
}

</mosaic_0001>

<llo_original>
// kernel: tpu_custom_call.1
$region0: #{tpu_custom_call.1}
  #allocation0 [shape = 'u32[]', space=smem, size = 0x4, offset = 0x4, fixed_abs, tag = 'smem constant byte address 0x4 - core index']
  #allocation1 [shape = 'u32[144,128]{1,0:T(1,128)}', space=vmem, size = 0x12000, scoped, tag = 'internal scratch']
  %s0 = inlined_call_operand.hbm [shape: bf16[8,20], index: 0, kind: input, shape index: {}]
  %s1 = inlined_call_operand.hbm [shape: bf16[8,32], index: 1, kind: input, shape index: {}]
  %s2 = inlined_call_operand.hbm [shape: f32[4,32], index: 2, kind: input, shape index: {}]
  %s3 = inlined_call_operand.hbm [shape: f32[8,128], index: 3, kind: output, shape index: {}]
  %s4 = sld [smem:[#allocation0]]
  $region34: #{tpu_custom_call.1} parent=0
    _
  %s6 = ssub.s32 1, %s4
  %s7 = scalar_select 0, %s6, %s4
  $region1: #{tpu_custom_call.1} parent=0
    #allocation2 [shape = 'u8[2048]{0}', space=vmem, size = 0x800, scoped, tag = 'input window, operand 0, single buffered']
    #allocation3 [shape = 's32[1]{0}', space=sflag, size = 0x4, scoped, tag = 'scoped memory for tpu_custom_call.1']
    #allocation4 [shape = 's32[1]{0}', space=sflag, size = 0x4, scoped, tag = 'scoped memory for tpu_custom_call.1']
    #allocation5 [shape = 'u8[2048]{0}', space=vmem, size = 0x800, scoped, tag = 'input window, operand 1, single buffered']
    #allocation6 [shape = 's32[1]{0}', space=sflag, size = 0x4, scoped, tag = 'scoped memory for tpu_custom_call.1']
    #allocation7 [shape = 'u8[2048]{0}', space=vmem, size = 0x800, scoped, tag = 'input window, operand 2, single buffered']
    #allocation8 [shape = 'u8[4096]{0}', space=vmem, size = 0x1000, scoped, tag = 'output window, operand 0, single buffered']
    %8 = vsyncpa [#allocation3], 0
    %9 = vsyncpa [#allocation6], 0
    %10 = vsyncpa [#allocation4], 0
    // Predicated region
    $region2: #{tpu_custom_call.1} parent=1 // pred_check
      _
    $region3: #{tpu_custom_call.1} parent=1 // pred_check_branch
      %12 = sbr.rel (0) target = $region5
    $region4: #{tpu_custom_call.1} parent=1 // pred_region
      %s14 = ssub.s32 64, 64
      %15 = vsyncadd [#allocation3], %s14
      %s17 = sshll.u32 [#allocation2], 4
      %s18 = int_to_ptr.vmem [resolvable:$true] %s17
      %20 = dma.hbm_to_vmem [thread:$0]  %s0, 64, %s18, [#allocation3]
    $region5: #{tpu_custom_call.1} parent=1 // pred_fallthru
      _
    // Predicated region
    $region6: #{tpu_custom_call.1} parent=1 // pred_check
      _
    $region7: #{tpu_custom_call.1} parent=1 // pred_check_branch
      %22 = sbr.rel (0) target = $region9
    $region8: #{tpu_custom_call.1} parent=1 // pred_region
      %s24 = ssub.s32 64, 64
      %25 = vsyncadd [#allocation6], %s24
      %s27 = sshll.u32 [#allocation5], 4
      %s28 = int_to_ptr.vmem [resolvable:$true] %s27
      %30 = dma.hbm_to_vmem [thread:$0]  %s1, 64, %s28, [#allocation6]
    $region9: #{tpu_custom_call.1} parent=1 // pred_fallthru
      _
    // Predicated region
    $region10: #{tpu_custom_call.1} parent=1 // pred_check
      _
    $region11: #{tpu_custom_call.1} parent=1 // pred_check_branch
      %32 = sbr.rel (0) target = $region13
    $region12: #{tpu_custom_call.1} parent=1 // pred_region
      %s34 = ssub.s32 64, 64
      %35 = vsyncadd [#allocation6], %s34
      %s37 = sshll.u32 [#allocation7], 4
      %s38 = int_to_ptr.vmem [resolvable:$true] %s37
      %40 = dma.hbm_to_vmem [thread:$0]  %s2, 64, %s38, [#allocation6]
    $region13: #{tpu_custom_call.1} parent=1 // pred_fallthru
      _
    // Predicated region
    $region14: #{tpu_custom_call.1} parent=1 // pred_check
      _
    $region15: #{tpu_custom_call.1} parent=1 // pred_check_branch
      %42 = sbr.rel (0) target = $region17
    $region16: #{tpu_custom_call.1} parent=1 // pred_region
      %43 = dma.done [#allocation3], 64
    $region17: #{tpu_custom_call.1} parent=1 // pred_fallthru
      _
    // Predicated region
    $region18: #{tpu_custom_call.1} parent=1 // pred_check
      _
    $region19: #{tpu_custom_call.1} parent=1 // pred_check_branch
      %45 = sbr.rel (0) target = $region21
    $region20: #{tpu_custom_call.1} parent=1 // pred_region
      %46 = dma.done [#allocation6], 64
    $region21: #{tpu_custom_call.1} parent=1 // pred_fallthru
      _
    // Predicated region
    $region22: #{tpu_custom_call.1} parent=1 // pred_check
      _
    $region23: #{tpu_custom_call.1} parent=1 // pred_check_branch
      %48 = sbr.rel (0) target = $region25
    $region24: #{tpu_custom_call.1} parent=1 // pred_region
      %49 = dma.done [#allocation6], 64
    $region25: #{tpu_custom_call.1} parent=1 // pred_fallthru
      _
    %v51 = vld [vmem:[#allocation2] sm:$0xf]
    %v52 = vld [vmem:[#allocation5] sm:$0xf]
    %v53 = vld [vmem:[#allocation7] sm:$0xf]
    %v54 = vlaneseq
    %v55 = vshrl.u32 %v54, 7
    %v56 = vsub.s32 0, %v55
    %v57 = vrot.slane %v53, %v56
    %vm58 = vcmask 64512
    %v60 = vsel %vm58, %v51, 0
    %vm62 = vcmask 1043456
    %v64 = vsel %vm62, %v52, 0
    %66 = vmatprep.subr.bf16.mxu0 0
    %67 = vmatpush1.bf16.msra.mxu0 0
    %68 = vmatprep.subr.bf16.mxu0 0
    %69 = vmatpush1.bf16.msra.mxu0 0
    %70 = vmatprep.subr.bf16.mxu0 0
    %71 = vmatpush1.bf16.msra.mxu0 0
    %72 = vmatprep.subr.bf16.mxu0 0
    %73 = vmatpush1.bf16.msra.mxu0 0
    %74 = vmatprep.subr.bf16.mxu0 0
    %75 = vmatpush1.bf16.msra.mxu0 0
    %76 = vmatprep.subr.bf16.mxu0 0
    %77 = vmatpush1.bf16.msra.mxu0 0
    %78 = vmatprep.subr.bf16.mxu0 0
    %79 = vmatpush1.bf16.msra.mxu0 0
    %80 = vmatprep.subr.bf16.mxu0 0
    %81 = vmatpush1.bf16.msra.mxu0 %v64
    %82 = vmatprep.subr.bf16.mxu0 0
    %83 = vmatpush2.bf16.msra.mxu0 0
    %84 = vmatprep.subr.bf16.mxu0 0
    %85 = vmatpush2.bf16.msra.mxu0 0
    %86 = vmatprep.subr.bf16.mxu0 0
    %87 = vmatpush2.bf16.msra.mxu0 0
    %88 = vmatprep.subr.bf16.mxu0 0
    %89 = vmatpush2.bf16.msra.mxu0 0
    %90 = vmatprep.subr.bf16.mxu0 0
    %91 = vmatpush2.bf16.msra.mxu0 0
    %92 = vmatprep.subr.bf16.mxu0 0
    %93 = vmatpush2.bf16.msra.mxu0 0
    %94 = vmatprep.subr.bf16.mxu0 0
    %95 = vmatpush2.bf16.msra.mxu0 0
    %96 = vmatprep.subr.bf16.mxu0 0
    %97 = vmatpush2.bf16.msra.mxu0 0
    %98 = vmatprep.mubr.bf16.mxu0 0
    %99 = vmatmul.mubr.bf16.gmra.mxu0 %v60
    %v100 = vpop.f32.mrf.mxu0
    %v101 = vadd.f32 %v57, %v100
    %v102 = vpop.f32.mrf.mxu0
    %v103 = vpop.f32.mrf.mxu0
    %v104 = vpop.f32.mrf.mxu0
    %105 = vdwg.mxu0
    %v106 = vlaneseq
    %v107 = vshrl.u32 %v106, 7
    %v108 = vsub.s32 1, %v107
    %v109 = vrot.slane %v53, %v108
    %v111 = vunpack.c.l.b16 %v51
    %v112 = vpack.c.b16 %v111, %v111
    %113 = vrot.lane.b32.xlu0 %v112, 124
    %v114 = vpop.permute.xlu0 %113
    %v116 = vsel %vm58, %v114, 0
    %118 = vmatprep.subr.bf16.mxu0 0
    %119 = vmatpush1.bf16.msra.mxu0 0
    %120 = vmatprep.subr.bf16.mxu0 0
    %121 = vmatpush1.bf16.msra.mxu0 0
    %122 = vmatprep.subr.bf16.mxu0 0
    %123 = vmatpush1.bf16.msra.mxu0 0
    %124 = vmatprep.subr.bf16.mxu0 0
    %125 = vmatpush1.bf16.msra.mxu0 0
    %126 = vmatprep.subr.bf16.mxu0 0
    %127 = vmatpush1.bf16.msra.mxu0 0
    %128 = vmatprep.subr.bf16.mxu0 0
    %129 = vmatpush1.bf16.msra.mxu0 0
    %130 = vmatprep.subr.bf16.mxu0 0
    %131 = vmatpush1.bf16.msra.mxu0 0
    %132 = vmatprep.subr.bf16.mxu0 0
    %133 = vmatpush1.bf16.msra.mxu0 %v64
    %134 = vmatprep.subr.bf16.mxu0 0
    %135 = vmatpush2.bf16.msra.mxu0 0
    %136 = vmatprep.subr.bf16.mxu0 0
    %137 = vmatpush2.bf16.msra.mxu0 0
    %138 = vmatprep.subr.bf16.mxu0 0
    %139 = vmatpush2.bf16.msra.mxu0 0
    %140 = vmatprep.subr.bf16.mxu0 0
    %141 = vmatpush2.bf16.msra.mxu0 0
    %142 = vmatprep.subr.bf16.mxu0 0
    %143 = vmatpush2.bf16.msra.mxu0 0
    %144 = vmatprep.subr.bf16.mxu0 0
    %145 = vmatpush2.bf16.msra.mxu0 0
    %146 = vmatprep.subr.bf16.mxu0 0
    %147 = vmatpush2.bf16.msra.mxu0 0
    %148 = vmatprep.subr.bf16.mxu0 0
    %149 = vmatpush2.bf16.msra.mxu0 0
    %150 = vmatprep.mubr.bf16.mxu0 0
    %151 = vmatmul.mubr.bf16.gmra.mxu0 %v116
    %v152 = vpop.f32.mrf.mxu0
    %v153 = vadd.f32 %v109, %v152
    %v154 = vpop.f32.mrf.mxu0
    %v155 = vpop.f32.mrf.mxu0
    %v156 = vpop.f32.mrf.mxu0
    %157 = vdwg.mxu0
    %v158 = vlaneseq
    %v159 = vshrl.u32 %v158, 7
    %v160 = vsub.s32 2, %v159
    %v161 = vrot.slane %v53, %v160
    %162 = vrot.lane.b32.xlu0 %v112, 120
    %v163 = vpop.permute.xlu0 %162
    %v165 = vsel %vm58, %v163, 0
    %167 = vmatprep.subr.bf16.mxu0 0
    %168 = vmatpush1.bf16.msra.mxu0 0
    %169 = vmatprep.subr.bf16.mxu0 0
    %170 = vmatpush1.bf16.msra.mxu0 0
    %171 = vmatprep.subr.bf16.mxu0 0
    %172 = vmatpush1.bf16.msra.mxu0 0
    %173 = vmatprep.subr.bf16.mxu0 0
    %174 = vmatpush1.bf16.msra.mxu0 0
    %175 = vmatprep.subr.bf16.mxu0 0
    %176 = vmatpush1.bf16.msra.mxu0 0
    %177 = vmatprep.subr.bf16.mxu0 0
    %178 = vmatpush1.bf16.msra.mxu0 0
    %179 = vmatprep.subr.bf16.mxu0 0
    %180 = vmatpush1.bf16.msra.mxu0 0
    %181 = vmatprep.subr.bf16.mxu0 0
    %182 = vmatpush1.bf16.msra.mxu0 %v64
    %183 = vmatprep.subr.bf16.mxu0 0
    %184 = vmatpush2.bf16.msra.mxu0 0
    %185 = vmatprep.subr.bf16.mxu0 0
    %186 = vmatpush2.bf16.msra.mxu0 0
    %187 = vmatprep.subr.bf16.mxu0 0
    %188 = vmatpush2.bf16.msra.mxu0 0
    %189 = vmatprep.subr.bf16.mxu0 0
    %190 = vmatpush2.bf16.msra.mxu0 0
    %191 = vmatprep.subr.bf16.mxu0 0
    %192 = vmatpush2.bf16.msra.mxu0 0
    %193 = vmatprep.subr.bf16.mxu0 0
    %194 = vmatpush2.bf16.msra.mxu0 0
    %195 = vmatprep.subr.bf16.mxu0 0
    %196 = vmatpush2.bf16.msra.mxu0 0
    %197 = vmatprep.subr.bf16.mxu0 0
    %198 = vmatpush2.bf16.msra.mxu0 0
    %199 = vmatprep.mubr.bf16.mxu0 0
    %200 = vmatmul.mubr.bf16.gmra.mxu0 %v165
    %v201 = vpop.f32.mrf.mxu0
    %v202 = vadd.f32 %v161, %v201
    %v203 = vpop.f32.mrf.mxu0
    %v204 = vpop.f32.mrf.mxu0
    %v205 = vpop.f32.mrf.mxu0
    %206 = vdwg.mxu0
    %v207 = vlaneseq
    %v208 = vshrl.u32 %v207, 7
    %v209 = vsub.s32 3, %v208
    %v210 = vrot.slane %v53, %v209
    %211 = vrot.lane.b32.xlu0 %v112, 116
    %v212 = vpop.permute.xlu0 %211
    %v214 = vsel %vm58, %v212, 0
    %216 = vmatprep.subr.bf16.mxu0 0
    %217 = vmatpush1.bf16.msra.mxu0 0
    %218 = vmatprep.subr.bf16.mxu0 0
    %219 = vmatpush1.bf16.msra.mxu0 0
    %220 = vmatprep.subr.bf16.mxu0 0
    %221 = vmatpush1.bf16.msra.mxu0 0
    %222 = vmatprep.subr.bf16.mxu0 0
    %223 = vmatpush1.bf16.msra.mxu0 0
    %224 = vmatprep.subr.bf16.mxu0 0
    %225 = vmatpush1.bf16.msra.mxu0 0
    %226 = vmatprep.subr.bf16.mxu0 0
    %227 = vmatpush1.bf16.msra.mxu0 0
    %228 = vmatprep.subr.bf16.mxu0 0
    %229 = vmatpush1.bf16.msra.mxu0 0
    %230 = vmatprep.subr.bf16.mxu0 0
    %231 = vmatpush1.bf16.msra.mxu0 %v64
    %232 = vmatprep.subr.bf16.mxu0 0
    %233 = vmatpush2.bf16.msra.mxu0 0
    %234 = vmatprep.subr.bf16.mxu0 0
    %235 = vmatpush2.bf16.msra.mxu0 0
    %236 = vmatprep.subr.bf16.mxu0 0
    %237 = vmatpush2.bf16.msra.mxu0 0
    %238 = vmatprep.subr.bf16.mxu0 0
    %239 = vmatpush2.bf16.msra.mxu0 0
    %240 = vmatprep.subr.bf16.mxu0 0
    %241 = vmatpush2.bf16.msra.mxu0 0
    %242 = vmatprep.subr.bf16.mxu0 0
    %243 = vmatpush2.bf16.msra.mxu0 0
    %244 = vmatprep.subr.bf16.mxu0 0
    %245 = vmatpush2.bf16.msra.mxu0 0
    %246 = vmatprep.subr.bf16.mxu0 0
    %247 = vmatpush2.bf16.msra.mxu0 0
    %248 = vmatprep.mubr.bf16.mxu0 0
    %249 = vmatmul.mubr.bf16.gmra.mxu0 %v214
    %v250 = vpop.f32.mrf.mxu0
    %v251 = vadd.f32 %v210, %v250
    %v252 = vpop.f32.mrf.mxu0
    %v253 = vpop.f32.mrf.mxu0
    %v254 = vpop.f32.mrf.mxu0
    %255 = vdwg.mxu0
    %257 = vrot.lane.b32.xlu0 %v153, 32
    %v258 = vpop.permute.xlu0 %257
    %261 = vrot.lane.b32.xlu0 %v202, 64
    %v262 = vpop.permute.xlu0 %261
    %265 = vrot.lane.b32.xlu0 %v251, 96
    %v266 = vpop.permute.xlu0 %265
    %vm268 = vcmask 261120
    %v269 = vsel %vm268, %v101, %v258
    %vm270 = vcmask 523264
    %v271 = vsel %vm270, %v269, %v262
    %vm272 = vcmask 785408
    %v273 = vsel %vm272, %v271, %v266
    %274 = vst [vmem:[#allocation8] sm:$0xff] %v273
    // Predicated region
    $region26: #{tpu_custom_call.1} parent=1 // pred_check
      _
    $region27: #{tpu_custom_call.1} parent=1 // pred_check_branch
      %276 = sbr.rel (0) target = $region29
    $region28: #{tpu_custom_call.1} parent=1 // pred_region
      %s278 = ssub.s32 128, 128
      %279 = vsyncadd [#allocation4], %s278
      %s281 = sshll.u32 [#allocation8], 4
      %s282 = int_to_ptr.vmem [resolvable:$true] %s281
      %284 = dma.vmem_to_hbm [thread:$0]  %s282, 128, %s3, [#allocation4]
    $region29: #{tpu_custom_call.1} parent=1 // pred_fallthru
      _
    // Predicated region
    $region30: #{tpu_custom_call.1} parent=1 // pred_check
      _
    $region31: #{tpu_custom_call.1} parent=1 // pred_check_branch
      %286 = sbr.rel (0) target = $region33
    $region32: #{tpu_custom_call.1} parent=1 // pred_region
      %287 = dma.done [#allocation4], 128
    $region33: #{tpu_custom_call.1} parent=1 // pred_fallthru
      _
    %288 = vsyncpa [#allocation3], 1
    %289 = vsyncpa [#allocation6], 1
    %290 = vsyncpa [#allocation4], 1

</llo_original>
